<compile_context>
chip_gen: v6e
topology: v6e:2x2x1
jax: 0.10.0
libtpu: 0.0.40
codegen_flags: <defaults>
</compile_context>

<pallas_src>
import functools
import math

import jax
import jax.numpy as jnp
from jax.experimental import pallas as pl
from jax.experimental.pallas import tpu as pltpu

LN_EPS = 1e-5


def _round_up(n, m):
    return ((n + m - 1) // m) * m


def _ffn_kernel(x_ref, gamma_ref, beta_ref, w1_ref, b1_ref, w2_ref, b2_ref, o_ref):
    # x_ref: (tm, D) tile of token rows (pipelined / double-buffered by BlockSpec).
    # gamma/beta/w1/b1/w2/b2: untiled, VMEM-resident (loaded once for the whole grid).
    x = x_ref[...].astype(jnp.float32)

    # ---- LayerNorm over the feature (lane) dim, stats in f32 ----
    mean = jnp.mean(x, axis=-1, keepdims=True)
    centered = x - mean
    var = jnp.mean(centered * centered, axis=-1, keepdims=True)
    inv = jax.lax.rsqrt(var + LN_EPS)
    xn = centered * inv
    xn = xn * gamma_ref[...].astype(jnp.float32) + beta_ref[...].astype(jnp.float32)

    # ---- Linear 1: (tm, D) @ (D, H) + b1  (MXU, f32 accumulation) ----
    w1 = w1_ref[...]
    h = jnp.dot(xn.astype(w1.dtype), w1, preferred_element_type=jnp.float32)
    h = h + b1_ref[...].astype(jnp.float32)

    # ---- GELU (exact erf form — matches torch.nn.GELU default); erf runs on the EUP ----
    h = 0.5 * h * (1.0 + jax.lax.erf(h * (1.0 / math.sqrt(2.0))))

    # ---- Linear 2: (tm, H) @ (H, D) + b2 ----
    w2 = w2_ref[...]
    y = jnp.dot(h.astype(w2.dtype), w2, preferred_element_type=jnp.float32)
    y = y + b2_ref[...].astype(jnp.float32)

    # Dropout with p=0.0 (inference) is the identity.
    # TODO(synk): training-mode dropout (p>0) would need pltpu.prng_seed +
    #             pltpu.prng_random_bits masking with 1/(1-p) rescale.
    o_ref[...] = y.astype(o_ref.dtype)


@functools.partial(jax.jit, static_argnames=("block_rows",))
def feedforward(x, gamma, beta, w1, b1, w2, b2, *, block_rows=512):
    # x: (B, S, D);  w1: (D, H);  w2: (H, D);  gamma/beta/b1/b2 as (1, feat) rows.
    B, S, D = x.shape
    H = w1.shape[1]
    rows = B * S
    x2d = x.reshape(rows, D)

    # Sublane packing: 8 rows for 32-bit dtypes, 16 for bf16.
    sublane = 16 if x.dtype == jnp.bfloat16 else 8

    # Row tile: big (default 512) but never larger than the padded row count, so small
    # inputs collapse to a single grid step (straight-line code, no pipeline).
    tm = min(_round_up(block_rows, sublane), _round_up(rows, sublane))

    # cdiv grid with a padded tail instead of a divisibility requirement.
    padded_rows = _round_up(rows, tm)
    if padded_rows != rows:
        x2d = jnp.pad(x2d, ((0, padded_rows - rows), (0, 0)))
    grid = (padded_rows // tm,)

    elem = jnp.dtype(x.dtype).itemsize
    param_bytes = sum(int(a.size) * jnp.dtype(a.dtype).itemsize
                      for a in (gamma, beta, w1, b1, w2, b2))
    cost = pl.CostEstimate(
        flops=4 * padded_rows * D * H,            # two matmuls: 2*M*K*N each
        transcendentals=padded_rows * H,          # erf per hidden activation
        bytes_accessed=2 * padded_rows * D * elem + param_bytes,
    )

    # Parameters: loaded once, kept resident in VMEM for the whole grid.
    resident = pl.BlockSpec(memory_space=pltpu.MemorySpace.VMEM)

    out2d = pl.pallas_call(
        _ffn_kernel,
        out_shape=jax.ShapeDtypeStruct((padded_rows, D), x.dtype),
        grid_spec=pltpu.PrefetchScalarGridSpec(
            num_scalar_prefetch=0,
            grid=grid,
            in_specs=[
                pl.BlockSpec((tm, D), lambda i: (i, 0)),  # x row tile (pipelined)
                resident,                                 # gamma  (1, D)
                resident,                                 # beta   (1, D)
                resident,                                 # W1     (D, H)
                resident,                                 # b1     (1, H)
                resident,                                 # W2     (H, D)
                resident,                                 # b2     (1, D)
            ],
            out_specs=pl.BlockSpec((tm, D), lambda i: (i, 0)),
        ),
        compiler_params=pltpu.CompilerParams(
            dimension_semantics=("parallel",),
        ),
        cost_estimate=cost,
    )(x2d, gamma, beta, w1, b1, w2, b2)

    return out2d[:rows].reshape(B, S, D)


def _reference(x, gamma, beta, w1, b1, w2, b2):
    xf = x.astype(jnp.float32)
    mean = jnp.mean(xf, axis=-1, keepdims=True)
    var = jnp.mean((xf - mean) ** 2, axis=-1, keepdims=True)
    xn = (xf - mean) * jax.lax.rsqrt(var + LN_EPS) * gamma[0] + beta[0]
    h = xn @ w1 + b1[0]
    h = 0.5 * h * (1.0 + jax.lax.erf(h / math.sqrt(2.0)))
    y = h @ w2 + b2[0]
    return y.astype(x.dtype)


if __name__ == "__main__":
    # Small shapes consistent with the module: dim=32, mult=4 -> hidden=128.
    B, S, D, MULT = 2, 8, 32, 4
    H = MULT * D

    key = jax.random.PRNGKey(0)
    kx, kw1, kb1, kw2, kb2 = jax.random.split(key, 5)

    x = jax.random.normal(kx, (B, S, D), dtype=jnp.float32)

    # Deterministic parameter init (nn.Linear-style uniform; LayerNorm affine = ones/zeros).
    gamma = jnp.ones((1, D), dtype=jnp.float32)
    beta = jnp.zeros((1, D), dtype=jnp.float32)
    lim1 = 1.0 / math.sqrt(D)
    w1 = jax.random.uniform(kw1, (D, H), minval=-lim1, maxval=lim1, dtype=jnp.float32)
    b1 = jax.random.uniform(kb1, (1, H), minval=-lim1, maxval=lim1, dtype=jnp.float32)
    lim2 = 1.0 / math.sqrt(H)
    w2 = jax.random.uniform(kw2, (H, D), minval=-lim2, maxval=lim2, dtype=jnp.float32)
    b2 = jax.random.uniform(kb2, (1, D), minval=-lim2, maxval=lim2, dtype=jnp.float32)

    out = feedforward(x, gamma, beta, w1, b1, w2, b2)
    out = jax.block_until_ready(out)

    ref = _reference(x, gamma, beta, w1, b1, w2, b2)
    assert out.shape == (B, S, D)
    assert jnp.allclose(out, ref, atol=1e-4, rtol=1e-4), "mismatch vs reference"

    # Also exercise the multi-step / padded-tail path (rows not divisible by tile).
    B2, S2 = 3, 7
    x2 = jax.random.normal(kx, (B2, S2, D), dtype=jnp.float32)
    out2 = jax.block_until_ready(
        feedforward(x2, gamma, beta, w1, b1, w2, b2, block_rows=16))
    ref2 = _reference(x2, gamma, beta, w1, b1, w2, b2)
    assert out2.shape == (B2, S2, D)
    assert jnp.allclose(out2, ref2, atol=1e-4, rtol=1e-4), "mismatch vs reference (padded)"

    print("KERNEL_OK")
</pallas_src>

<mosaic_0001>
module attributes {stable_mosaic.version = 11 : i64} {
  func.func @_ffn_kernel(%arg0: i32, %arg1: memref<16x32xf32, #tpu.memory_space<vmem>>, %arg2: memref<1x32xf32, #tpu.memory_space<vmem>>, %arg3: memref<1x32xf32, #tpu.memory_space<vmem>>, %arg4: memref<32x128xf32, #tpu.memory_space<vmem>>, %arg5: memref<1x128xf32, #tpu.memory_space<vmem>>, %arg6: memref<128x32xf32, #tpu.memory_space<vmem>>, %arg7: memref<1x32xf32, #tpu.memory_space<vmem>>, %arg8: memref<16x32xf32, #tpu.memory_space<vmem>>) attributes {dimension_semantics = [#tpu.dimension_semantics<parallel>], iteration_bounds = array<i64: 1>, scalar_prefetch = 0 : i64, scratch_operands = 0 : i64, tpu.core_type = #tpu.core_type<tc>, window_params = [{transform_indices = @transform_0, window_bounds = array<i64: 16, 32>}, {pipeline_mode = #tpu.pipeline_mode<synchronous>, transform_indices = @transform_1, window_bounds = array<i64: 1, 32>}, {pipeline_mode = #tpu.pipeline_mode<synchronous>, transform_indices = @transform_2, window_bounds = array<i64: 1, 32>}, {pipeline_mode = #tpu.pipeline_mode<synchronous>, transform_indices = @transform_3, window_bounds = array<i64: 32, 128>}, {pipeline_mode = #tpu.pipeline_mode<synchronous>, transform_indices = @transform_4, window_bounds = array<i64: 1, 128>}, {pipeline_mode = #tpu.pipeline_mode<synchronous>, transform_indices = @transform_5, window_bounds = array<i64: 128, 32>}, {pipeline_mode = #tpu.pipeline_mode<synchronous>, transform_indices = @transform_6, window_bounds = array<i64: 1, 32>}, {transform_indices = @transform_7, window_bounds = array<i64: 16, 32>}]} {
    %c0 = arith.constant 0 : index
    %c0_0 = arith.constant 0 : index
    %0 = vector.load %arg1[%c0, %c0_0] : memref<16x32xf32, #tpu.memory_space<vmem>>, vector<16x32xf32>
    %cst = arith.constant dense<0.000000e+00> : vector<16xf32>
    %1 = vector.multi_reduction <add>, %0, %cst [1] : vector<16x32xf32> to vector<16xf32>
    %2 = vector.shape_cast %1 : vector<16xf32> to vector<16x1xf32>
    %cst_1 = arith.constant 3.200000e+01 : f32
    %3 = vector.broadcast %cst_1 : f32 to vector<16x1xf32>
    %4 = arith.divf %2, %3 : vector<16x1xf32>
    %5 = vector.broadcast %4 : vector<16x1xf32> to vector<16x32xf32>
    %6 = arith.subf %0, %5 : vector<16x32xf32>
    %7 = arith.mulf %6, %6 : vector<16x32xf32>
    %cst_2 = arith.constant dense<0.000000e+00> : vector<16xf32>
    %8 = vector.multi_reduction <add>, %7, %cst_2 [1] : vector<16x32xf32> to vector<16xf32>
    %9 = vector.shape_cast %8 : vector<16xf32> to vector<16x1xf32>
    %cst_3 = arith.constant 3.200000e+01 : f32
    %10 = vector.broadcast %cst_3 : f32 to vector<16x1xf32>
    %11 = arith.divf %9, %10 : vector<16x1xf32>
    %cst_4 = arith.constant 9.99999974E-6 : f32
    %12 = vector.broadcast %cst_4 : f32 to vector<16x1xf32>
    %13 = arith.addf %11, %12 : vector<16x1xf32>
    %14 = math.rsqrt %13 : vector<16x1xf32>
    %15 = vector.broadcast %14 : vector<16x1xf32> to vector<16x32xf32>
    %16 = arith.mulf %6, %15 : vector<16x32xf32>
    %c0_5 = arith.constant 0 : index
    %c0_6 = arith.constant 0 : index
    %17 = vector.load %arg2[%c0_5, %c0_6] : memref<1x32xf32, #tpu.memory_space<vmem>>, vector<1x32xf32>
    %18 = vector.broadcast %17 : vector<1x32xf32> to vector<16x32xf32>
    %19 = arith.mulf %16, %18 : vector<16x32xf32>
    %c0_7 = arith.constant 0 : index
    %c0_8 = arith.constant 0 : index
    %20 = vector.load %arg3[%c0_7, %c0_8] : memref<1x32xf32, #tpu.memory_space<vmem>>, vector<1x32xf32>
    %21 = vector.broadcast %20 : vector<1x32xf32> to vector<16x32xf32>
    %22 = arith.addf %19, %21 : vector<16x32xf32>
    %c0_9 = arith.constant 0 : index
    %c0_10 = arith.constant 0 : index
    %23 = vector.load %arg4[%c0_9, %c0_10] : memref<32x128xf32, #tpu.memory_space<vmem>>, vector<32x128xf32>
    %cst_11 = arith.constant dense<0.000000e+00> : vector<16x128xf32>
    %24 = tpu.matmul %22, %23, %cst_11 {dimension_numbers = #tpu.dot_dimension_numbers<[1], [0], [0], [1], [0, 0, 1, 1], [], []>} : vector<16x32xf32>, vector<32x128xf32>, vector<16x128xf32> -> vector<16x128xf32>
    %c0_12 = arith.constant 0 : index
    %c0_13 = arith.constant 0 : index
    %25 = vector.load %arg5[%c0_12, %c0_13] : memref<1x128xf32, #tpu.memory_space<vmem>>, vector<1x128xf32>
    %26 = vector.broadcast %25 : vector<1x128xf32> to vector<16x128xf32>
    %27 = arith.addf %24, %26 : vector<16x128xf32>
    %cst_14 = arith.constant 5.000000e-01 : f32
    %28 = vector.broadcast %cst_14 : f32 to vector<16x128xf32>
    %29 = arith.mulf %28, %27 : vector<16x128xf32>
    %cst_15 = arith.constant 0.707106769 : f32
    %30 = vector.broadcast %cst_15 : f32 to vector<16x128xf32>
    %31 = arith.mulf %27, %30 : vector<16x128xf32>
    %32 = math.erf %31 : vector<16x128xf32>
    %cst_16 = arith.constant 1.000000e+00 : f32
    %33 = vector.broadcast %cst_16 : f32 to vector<16x128xf32>
    %34 = arith.addf %33, %32 : vector<16x128xf32>
    %35 = arith.mulf %29, %34 : vector<16x128xf32>
    %c0_17 = arith.constant 0 : index
    %c0_18 = arith.constant 0 : index
    %36 = vector.load %arg6[%c0_17, %c0_18] : memref<128x32xf32, #tpu.memory_space<vmem>>, vector<128x32xf32>
    %cst_19 = arith.constant dense<0.000000e+00> : vector<16x32xf32>
    %37 = tpu.matmul %35, %36, %cst_19 {dimension_numbers = #tpu.dot_dimension_numbers<[1], [0], [0], [1], [0, 0, 1, 1], [], []>} : vector<16x128xf32>, vector<128x32xf32>, vector<16x32xf32> -> vector<16x32xf32>
    %c0_20 = arith.constant 0 : index
    %c0_21 = arith.constant 0 : index
    %38 = vector.load %arg7[%c0_20, %c0_21] : memref<1x32xf32, #tpu.memory_space<vmem>>, vector<1x32xf32>
    %39 = vector.broadcast %38 : vector<1x32xf32> to vector<16x32xf32>
    %40 = arith.addf %37, %39 : vector<16x32xf32>
    %c0_22 = arith.constant 0 : index
    %c0_23 = arith.constant 0 : index
    %41 = vector.load %arg8[%c0_22, %c0_23] : memref<16x32xf32, #tpu.memory_space<vmem>>, vector<16x32xf32>
    tpu.vector_store %arg8[%c0_22, %c0_23], %40 {strides = array<i32>} : memref<16x32xf32, #tpu.memory_space<vmem>>, vector<16x32xf32>,
    return
  }
  func.func @transform_0(%arg0: i32) -> (i32, i32) {
    %c0_i32 = arith.constant 0 : i32
    %c0_i32_0 = arith.constant 0 : i32
    return %arg0, %c0_i32 : i32, i32
  }
  func.func @transform_1(%arg0: i32) -> (i32, i32) {
    %c0_i32 = arith.constant 0 : i32
    %c0_i32_0 = arith.constant 0 : i32
    %c0_i32_1 = arith.constant 0 : i32
    return %c0_i32, %c0_i32_0 : i32, i32
  }
  func.func @transform_2(%arg0: i32) -> (i32, i32) {
    %c0_i32 = arith.constant 0 : i32
    %c0_i32_0 = arith.constant 0 : i32
    %c0_i32_1 = arith.constant 0 : i32
    return %c0_i32, %c0_i32_0 : i32, i32
  }
  func.func @transform_3(%arg0: i32) -> (i32, i32) {
    %c0_i32 = arith.constant 0 : i32
    %c0_i32_0 = arith.constant 0 : i32
    %c0_i32_1 = arith.constant 0 : i32
    return %c0_i32, %c0_i32_0 : i32, i32
  }
  func.func @transform_4(%arg0: i32) -> (i32, i32) {
    %c0_i32 = arith.constant 0 : i32
    %c0_i32_0 = arith.constant 0 : i32
    %c0_i32_1 = arith.constant 0 : i32
    return %c0_i32, %c0_i32_0 : i32, i32
  }
  func.func @transform_5(%arg0: i32) -> (i32, i32) {
    %c0_i32 = arith.constant 0 : i32
    %c0_i32_0 = arith.constant 0 : i32
    %c0_i32_1 = arith.constant 0 : i32
    return %c0_i32, %c0_i32_0 : i32, i32
  }
  func.func @transform_6(%arg0: i32) -> (i32, i32) {
    %c0_i32 = arith.constant 0 : i32
    %c0_i32_0 = arith.constant 0 : i32
    %c0_i32_1 = arith.constant 0 : i32
    return %c0_i32, %c0_i32_0 : i32, i32
  }
  func.func @transform_7(%arg0: i32) -> (i32, i32) {
    %c0_i32 = arith.constant 0 : i32
    %c0_i32_0 = arith.constant 0 : i32
    return %arg0, %c0_i32 : i32, i32
  }
}

</mosaic_0001>

<llo_original>
// kernel: feedforward.1
$region0: #{feedforward.1}
  #allocation0 [shape = 'u32[]', space=smem, size = 0x4, offset = 0x4, fixed_abs, tag = 'smem constant byte address 0x4 - core index']
  #allocation1 [shape = 'u32[144,128]{1,0:T(1,128)}', space=vmem, size = 0x12000, scoped, tag = 'internal scratch']
  %s0 = inlined_call_operand.vmem [shape: f32[16,32], index: 0, kind: input, shape index: {}]
  %s1 = inlined_call_operand.vmem [shape: f32[1,32], index: 1, kind: input, shape index: {}]
  %s2 = inlined_call_operand.vmem [shape: f32[1,32], index: 2, kind: input, shape index: {}]
  %s3 = inlined_call_operand.vmem [shape: f32[32,128], index: 3, kind: input, shape index: {}]
  %s4 = inlined_call_operand.vmem [shape: f32[1,128], index: 4, kind: input, shape index: {}]
  %s5 = inlined_call_operand.vmem [shape: f32[128,32], index: 5, kind: input, shape index: {}]
  %s6 = inlined_call_operand.vmem [shape: f32[1,32], index: 6, kind: input, shape index: {}]
  %s7 = inlined_call_operand.hbm [shape: f32[16,32], index: 7, kind: output, shape index: {}]
  %s8 = sld [smem:[#allocation0]]
  $region38: #{feedforward.1} parent=0
    _
  %s10 = ssub.s32 1, %s8
  %s11 = scalar_select 0, %s10, %s8
  $region1: #{feedforward.1} parent=0
    #allocation2 [shape = 'u8[8192]{0}', space=vmem, size = 0x2000, scoped, tag = 'output window, operand 0, single buffered']
    #allocation3 [shape = 's32[1]{0}', space=sflag, size = 0x4, scoped, tag = 'scoped memory for feedforward.1']
    %12 = vsyncpa [#allocation3], 0
    // Predicated region
    $region2: #{feedforward.1} parent=1 // pred_check
      _
    $region3: #{feedforward.1} parent=1 // pred_check_branch
      %14 = sbr.rel (0) target = $region5
    $region4: #{feedforward.1} parent=1 // pred_region
      _
    $region5: #{feedforward.1} parent=1 // pred_fallthru
      _
    // Predicated region
    $region6: #{feedforward.1} parent=1 // pred_check
      _
    $region7: #{feedforward.1} parent=1 // pred_check_branch
      %16 = sbr.rel (0) target = $region9
    $region8: #{feedforward.1} parent=1 // pred_region
      _
    $region9: #{feedforward.1} parent=1 // pred_fallthru
      _
    // Predicated region
    $region10: #{feedforward.1} parent=1 // pred_check
      _
    $region11: #{feedforward.1} parent=1 // pred_check_branch
      %18 = sbr.rel (0) target = $region13
    $region12: #{feedforward.1} parent=1 // pred_region
      _
    $region13: #{feedforward.1} parent=1 // pred_fallthru
      _
    // Predicated region
    $region14: #{feedforward.1} parent=1 // pred_check
      _
    $region15: #{feedforward.1} parent=1 // pred_check_branch
      %20 = sbr.rel (0) target = $region17
    $region16: #{feedforward.1} parent=1 // pred_region
      _
    $region17: #{feedforward.1} parent=1 // pred_fallthru
      _
    // Predicated region
    $region18: #{feedforward.1} parent=1 // pred_check
      _
    $region19: #{feedforward.1} parent=1 // pred_check_branch
      %22 = sbr.rel (0) target = $region21
    $region20: #{feedforward.1} parent=1 // pred_region
      _
    $region21: #{feedforward.1} parent=1 // pred_fallthru
      _
    // Predicated region
    $region22: #{feedforward.1} parent=1 // pred_check
      _
    $region23: #{feedforward.1} parent=1 // pred_check_branch
      %24 = sbr.rel (0) target = $region25
    $region24: #{feedforward.1} parent=1 // pred_region
      _
    $region25: #{feedforward.1} parent=1 // pred_fallthru
      _
    // Predicated region
    $region26: #{feedforward.1} parent=1 // pred_check
      _
    $region27: #{feedforward.1} parent=1 // pred_check_branch
      %26 = sbr.rel (0) target = $region29
    $region28: #{feedforward.1} parent=1 // pred_region
      _
    $region29: #{feedforward.1} parent=1 // pred_fallthru
      _
    %v27 = vld [vmem:[%s0] sm:$0xff]
    %v28 = vld [vmem:[%s0 + $0x8] sm:$0xff]
    %vm29 = vcmask 261120
    %v30 = vsel %vm29, %v27, 0.0
    %31 = vadd.xlane.f32.xlu0 %v30
    %v32 = vpop.xlane.xlu0 %31
    %v33 = vsel %vm29, %v28, 0.0
    %34 = vadd.xlane.f32.xlu0 %v33
    %v35 = vpop.xlane.xlu0 %34
    %v36 = vrcp.pop 32.0
    %v37 = vmul.f32 %v32, %v36
    %v38 = vmul.f32 %v35, %v36
    %v39 = vsub.f32 %v27, %v37
    %v40 = vsub.f32 %v28, %v38
    %v41 = vmul.f32 %v39, %v39
    %v42 = vmul.f32 %v40, %v40
    %v43 = vsel %vm29, %v41, 0.0
    %44 = vadd.xlane.f32.xlu0 %v43
    %v45 = vpop.xlane.xlu0 %44
    %v46 = vsel %vm29, %v42, 0.0
    %47 = vadd.xlane.f32.xlu0 %v46
    %v48 = vpop.xlane.xlu0 %47
    %v49 = vmul.f32 %v45, %v36
    %v50 = vmul.f32 %v48, %v36
    %v51 = vadd.f32 %v49, 1e-05
    %v52 = vadd.f32 %v50, 1e-05
    %v53 = vrsqrt.pop %v51
    %v54 = vrsqrt.pop %v52
    %v55 = vmul.f32 %v39, %v53
    %v56 = vmul.f32 %v40, %v54
    %v57 = vld [vmem:[%s1] sm:$0x1]
    %v59 = vlaneseq
    %v60 = vshrl.u32 %v59, 7
    %v61 = vsub.s32 0, %v60
    %v62 = vrot.slane %v57, %v61
    %v64 = vmul.f32 %v55, %v62
    %v65 = vmul.f32 %v56, %v62
    %v66 = vld [vmem:[%s2] sm:$0x1]
    %v68 = vlaneseq
    %v69 = vshrl.u32 %v68, 7
    %v70 = vsub.s32 0, %v69
    %v71 = vrot.slane %v66, %v70
    %v73 = vadd.f32 %v64, %v71
    %v74 = vadd.f32 %v65, %v71
    %v75 = vld [vmem:[%s3] sm:$0xff]
    %v76 = vld [vmem:[%s3 + $0x8] sm:$0xff]
    %v77 = vld [vmem:[%s3 + $0x10] sm:$0xff]
    %v78 = vld [vmem:[%s3 + $0x18] sm:$0xff]
    %v79 = vld [vmem:[%s4] sm:$0x1]
    %v81 = vlaneseq
    %v82 = vshrl.u32 %v81, 7
    %v83 = vsub.s32 0, %v82
    %v84 = vrot.slane %v79, %v83
    %v87 = vsel %vm29, %v73, 0
    %v90 = vsel %vm29, %v74, 0
    %92 = vmatprep.subr.mxu0 0.0
    %93 = vmatpush1.msra.mxu0 0.0
    %94 = vmatprep.subr.mxu0 0.0
    %95 = vmatpush1.msra.mxu0 0.0
    %96 = vmatprep.subr.mxu0 0.0
    %97 = vmatpush1.msra.mxu0 0.0
    %98 = vmatprep.subr.mxu0 0.0
    %99 = vmatpush1.msra.mxu0 0.0
    %100 = vmatprep.subr.mxu0 0.0
    %101 = vmatpush1.msra.mxu0 0.0
    %102 = vmatprep.subr.mxu0 0.0
    %103 = vmatpush1.msra.mxu0 0.0
    %104 = vmatprep.subr.mxu0 0.0
    %105 = vmatpush1.msra.mxu0 0.0
    %106 = vmatprep.subr.mxu0 0.0
    %107 = vmatpush1.msra.mxu0 0.0
    %108 = vmatprep.subr.mxu0 0.0
    %109 = vmatpush1.msra.mxu0 0.0
    %110 = vmatprep.subr.mxu0 0.0
    %111 = vmatpush1.msra.mxu0 0.0
    %112 = vmatprep.subr.mxu0 0.0
    %113 = vmatpush1.msra.mxu0 0.0
    %114 = vmatprep.subr.mxu0 0.0
    %115 = vmatpush1.msra.mxu0 0.0
    %116 = vmatprep.subr.mxu0 0.0
    %117 = vmatpush1.msra.mxu0 %v78
    %118 = vmatprep.subr.mxu0 0.0
    %119 = vmatpush1.msra.mxu0 %v77
    %120 = vmatprep.subr.mxu0 0.0
    %121 = vmatpush1.msra.mxu0 %v76
    %122 = vmatprep.subr.mxu0 0.0
    %123 = vmatpush1.msra.mxu0 %v75
    %124 = vmatprep.subr.mxu0 0.0
    %125 = vmatpush2.msra.mxu0 0.0
    %126 = vmatprep.subr.mxu0 0.0
    %127 = vmatpush2.msra.mxu0 0.0
    %128 = vmatprep.subr.mxu0 0.0
    %129 = vmatpush2.msra.mxu0 0.0
    %130 = vmatprep.subr.mxu0 0.0
    %131 = vmatpush2.msra.mxu0 0.0
    %132 = vmatprep.subr.mxu0 0.0
    %133 = vmatpush2.msra.mxu0 0.0
    %134 = vmatprep.subr.mxu0 0.0
    %135 = vmatpush2.msra.mxu0 0.0
    %136 = vmatprep.subr.mxu0 0.0
    %137 = vmatpush2.msra.mxu0 0.0
    %138 = vmatprep.subr.mxu0 0.0
    %139 = vmatpush2.msra.mxu0 0.0
    %140 = vmatprep.subr.mxu0 0.0
    %141 = vmatpush2.msra.mxu0 0.0
    %142 = vmatprep.subr.mxu0 0.0
    %143 = vmatpush2.msra.mxu0 0.0
    %144 = vmatprep.subr.mxu0 0.0
    %145 = vmatpush2.msra.mxu0 0.0
    %146 = vmatprep.subr.mxu0 0.0
    %147 = vmatpush2.msra.mxu0 0.0
    %148 = vmatprep.subr.mxu0 0.0
    %149 = vmatpush2.msra.mxu0 0.0
    %150 = vmatprep.subr.mxu0 0.0
    %151 = vmatpush2.msra.mxu0 0.0
    %152 = vmatprep.subr.mxu0 0.0
    %153 = vmatpush2.msra.mxu0 0.0
    %154 = vmatprep.subr.mxu0 0.0
    %155 = vmatpush2.msra.mxu0 0.0
    %156 = vmatprep.mubr.f32.mxu0 0.0
    %157 = vmatmul.mubr.f32.gmra.mxu0 %v87
    %v158 = vpop.f32.mrf.mxu0
    %v159 = vadd.f32 %v84, %v158
    %v160 = vpop.f32.mrf.mxu0
    %161 = vmatprep.mubr.f32.mxu0 0.0
    %162 = vmatmul.mubr.f32.gmra.mxu0 %v90
    %v163 = vpop.f32.mrf.mxu0
    %v164 = vadd.f32 %v84, %v163
    %v165 = vpop.f32.mrf.mxu0
    %166 = vdwg.mxu0
    %v167 = vmul.f32 %v159, 0.5
    %v168 = vmul.f32 %v164, 0.5
    %v169 = vmul.f32 %v159, 0.70710677
    %v170 = vmul.f32 %v164, 0.70710677
    %v171 = verf.f32.pop %v169
    %v172 = verf.f32.pop %v170
    %v173 = vadd.f32 %v171, 1.0
    %v174 = vadd.f32 %v172, 1.0
    %v175 = vmul.f32 %v167, %v173
    %v176 = vmul.f32 %v168, %v174
    %v177 = vld [vmem:[%s5] sm:$0xff]
    %v178 = vld [vmem:[%s5 + $0x8] sm:$0xff]
    %v179 = vld [vmem:[%s5 + $0x10] sm:$0xff]
    %v180 = vld [vmem:[%s5 + $0x18] sm:$0xff]
    %v181 = vld [vmem:[%s5 + $0x20] sm:$0xff]
    %v182 = vld [vmem:[%s5 + $0x28] sm:$0xff]
    %v183 = vld [vmem:[%s5 + $0x30] sm:$0xff]
    %v184 = vld [vmem:[%s5 + $0x38] sm:$0xff]
    %v185 = vld [vmem:[%s5 + $0x40] sm:$0xff]
    %v186 = vld [vmem:[%s5 + $0x48] sm:$0xff]
    %v187 = vld [vmem:[%s5 + $0x50] sm:$0xff]
    %v188 = vld [vmem:[%s5 + $0x58] sm:$0xff]
    %v189 = vld [vmem:[%s5 + $0x60] sm:$0xff]
    %v190 = vld [vmem:[%s5 + $0x68] sm:$0xff]
    %v191 = vld [vmem:[%s5 + $0x70] sm:$0xff]
    %v192 = vld [vmem:[%s5 + $0x78] sm:$0xff]
    %v193 = vld [vmem:[%s6] sm:$0x1]
    %v195 = vlaneseq
    %v196 = vshrl.u32 %v195, 7
    %v197 = vsub.s32 0, %v196
    %v198 = vrot.slane %v193, %v197
    %200 = vmatprep.subr.mxu0 0.0
    %201 = vmatpush1.msra.mxu0 %v192
    %202 = vmatprep.subr.mxu0 0.0
    %203 = vmatpush1.msra.mxu0 %v191
    %204 = vmatprep.subr.mxu0 0.0
    %205 = vmatpush1.msra.mxu0 %v190
    %206 = vmatprep.subr.mxu0 0.0
    %207 = vmatpush1.msra.mxu0 %v189
    %208 = vmatprep.subr.mxu0 0.0
    %209 = vmatpush1.msra.mxu0 %v188
    %210 = vmatprep.subr.mxu0 0.0
    %211 = vmatpush1.msra.mxu0 %v187
    %212 = vmatprep.subr.mxu0 0.0
    %213 = vmatpush1.msra.mxu0 %v186
    %214 = vmatprep.subr.mxu0 0.0
    %215 = vmatpush1.msra.mxu0 %v185
    %216 = vmatprep.subr.mxu0 0.0
    %217 = vmatpush1.msra.mxu0 %v184
    %218 = vmatprep.subr.mxu0 0.0
    %219 = vmatpush1.msra.mxu0 %v183
    %220 = vmatprep.subr.mxu0 0.0
    %221 = vmatpush1.msra.mxu0 %v182
    %222 = vmatprep.subr.mxu0 0.0
    %223 = vmatpush1.msra.mxu0 %v181
    %224 = vmatprep.subr.mxu0 0.0
    %225 = vmatpush1.msra.mxu0 %v180
    %226 = vmatprep.subr.mxu0 0.0
    %227 = vmatpush1.msra.mxu0 %v179
    %228 = vmatprep.subr.mxu0 0.0
    %229 = vmatpush1.msra.mxu0 %v178
    %230 = vmatprep.subr.mxu0 0.0
    %231 = vmatpush1.msra.mxu0 %v177
    %232 = vmatprep.subr.mxu0 0.0
    %233 = vmatpush2.msra.mxu0 0.0
    %234 = vmatprep.subr.mxu0 0.0
    %235 = vmatpush2.msra.mxu0 0.0
    %236 = vmatprep.subr.mxu0 0.0
    %237 = vmatpush2.msra.mxu0 0.0
    %238 = vmatprep.subr.mxu0 0.0
    %239 = vmatpush2.msra.mxu0 0.0
    %240 = vmatprep.subr.mxu0 0.0
    %241 = vmatpush2.msra.mxu0 0.0
    %242 = vmatprep.subr.mxu0 0.0
    %243 = vmatpush2.msra.mxu0 0.0
    %244 = vmatprep.subr.mxu0 0.0
    %245 = vmatpush2.msra.mxu0 0.0
    %246 = vmatprep.subr.mxu0 0.0
    %247 = vmatpush2.msra.mxu0 0.0
    %248 = vmatprep.subr.mxu0 0.0
    %249 = vmatpush2.msra.mxu0 0.0
    %250 = vmatprep.subr.mxu0 0.0
    %251 = vmatpush2.msra.mxu0 0.0
    %252 = vmatprep.subr.mxu0 0.0
    %253 = vmatpush2.msra.mxu0 0.0
    %254 = vmatprep.subr.mxu0 0.0
    %255 = vmatpush2.msra.mxu0 0.0
    %256 = vmatprep.subr.mxu0 0.0
    %257 = vmatpush2.msra.mxu0 0.0
    %258 = vmatprep.subr.mxu0 0.0
    %259 = vmatpush2.msra.mxu0 0.0
    %260 = vmatprep.subr.mxu0 0.0
    %261 = vmatpush2.msra.mxu0 0.0
    %262 = vmatprep.subr.mxu0 0.0
    %263 = vmatpush2.msra.mxu0 0.0
    %264 = vmatprep.mubr.f32.mxu0 0.0
    %265 = vmatmul.mubr.f32.gmra.mxu0 %v175
    %v266 = vpop.f32.mrf.mxu0
    %v267 = vadd.f32 %v198, %v266
    %v268 = vpop.f32.mrf.mxu0
    %269 = vmatprep.mubr.f32.mxu0 0.0
    %270 = vmatmul.mubr.f32.gmra.mxu0 %v176
    %v271 = vpop.f32.mrf.mxu0
    %v272 = vadd.f32 %v198, %v271
    %v273 = vpop.f32.mrf.mxu0
    %274 = vdwg.mxu0
    %275 = vst.msk [vmem:[#allocation2] sm:$0xff] %vm29, %v267
    %276 = vst.msk [vmem:[#allocation2 + $0x8] sm:$0xff] %vm29, %v272
    // Predicated region
    $region30: #{feedforward.1} parent=1 // pred_check
      _
    $region31: #{feedforward.1} parent=1 // pred_check_branch
      %278 = sbr.rel (0) target = $region33
    $region32: #{feedforward.1} parent=1 // pred_region
      %s280 = ssub.s32 256, 256
      %281 = vsyncadd [#allocation3], %s280
      %s282 = sshll.u32 [#allocation2], 4
      %s283 = int_to_ptr.vmem [resolvable:$true] %s282
      %288 = dma.vmem_to_hbm [thread:$0]  %s283, 256, %s7, [#allocation3], 128, 128, 8
    $region33: #{feedforward.1} parent=1 // pred_fallthru
      _
    // Predicated region
    $region34: #{feedforward.1} parent=1 // pred_check
      _
    $region35: #{feedforward.1} parent=1 // pred_check_branch
      %290 = sbr.rel (0) target = $region37
    $region36: #{feedforward.1} parent=1 // pred_region
      %291 = dma.done [#allocation3], 256
    $region37: #{feedforward.1} parent=1 // pred_fallthru
      _
    %292 = vsyncpa [#allocation3], 1

</llo_original>
